<compile_context>
chip_gen: v6e
topology: v6e:2x2x1
jax: 0.10.0
libtpu: 0.0.40
codegen_flags: <defaults>
</compile_context>

<pallas_src>
import functools

import jax
import jax.numpy as jnp
from jax.experimental import pallas as pl
from jax.experimental.pallas import tpu as pltpu


def _round_up(x: int, m: int) -> int:
    return ((x + m - 1) // m) * m


def _cdiv(a: int, b: int) -> int:
    return (a + b - 1) // b


def _vmem_budget_and_cap():
    """Generation-aware (budget, physical_capacity) in bytes."""
    cap = 128 * 1024 * 1024
    try:
        info = pltpu.get_tpu_info()
        cap = int(getattr(info, "vmem_capacity_bytes", cap))
    except Exception:
        pass  # fall back to a conservative capacity if the query is unavailable
    # Use at most ~half of physical VMEM for our operands (leave headroom for
    # Mosaic internal scratch / spills), capped at 48 MiB:
    #   v5e/v6e (128 MiB physical) -> 48 MiB budget;  v7x (64 MiB/TC) -> 32 MiB.
    budget = max(12 * 1024 * 1024, min(cap // 2, 48 * 1024 * 1024))
    return budget, cap


def _fused_mlp_kernel(x_ref, *refs, num_layers: int, sigmoid_output: bool,
                      compute_dtype):
    """Whole MLP for one (tm, in_dim) tile of tokens, fully resident in VMEM.

    refs = (w0, b0, w1, b1, ..., w_{L-1}, b_{L-1}, out_ref)
      w_i: (in_i, out_pad_i)  -- transposed, zero-padded cols, compute_dtype
      b_i: (1, out_pad_i)     -- zero-padded, f32
    """
    out_ref = refs[-1]
    h = x_ref[...]
    for i in range(num_layers):
        w = refs[2 * i][...]
        b = refs[2 * i + 1][...]
        y = jnp.dot(h.astype(compute_dtype), w.astype(compute_dtype),
                    preferred_element_type=jnp.float32)   # MXU, f32 accumulate
        y = y + b                                          # f32 bias add (VPU)
        if i < num_layers - 1:
            h = jnp.maximum(y, 0.0)                        # fused ReLU (VPU)
        else:
            h = y
    if sigmoid_output:
        # sigmoid(y) == 0.5*(tanh(0.5*y)+1): one EUP transcendental, not exp+div.
        h = 0.5 * (jnp.tanh(0.5 * h) + 1.0)
    out_ref[...] = h.astype(out_ref.dtype)


def fused_mlp(x2, weights_pad, biases_pad, out_dim, sigmoid_output,
              compute_dtype=jnp.bfloat16, out_dtype=None, tm_max=1024):
    """Run the whole MLP on a [M, in_dim] activation matrix in one pallas_call."""
    M, in_dim = x2.shape
    num_layers = len(weights_pad)
    assert weights_pad[0].shape[0] == in_dim
    out_pad = weights_pad[-1].shape[1]
    assert out_dim <= out_pad
    # TODO(synk): pass out_dtype=jnp.bfloat16 if the consumer tolerates it to
    # halve output writeback bytes (matters most on v5e's single vst slot).
    out_dtype = jnp.dtype(x2.dtype) if out_dtype is None else jnp.dtype(out_dtype)

    budget, vmem_cap = _vmem_budget_and_cap()

    x_item = jnp.dtype(x2.dtype).itemsize
    o_item = out_dtype.itemsize
    max_cols = max(int(w.shape[1]) for w in weights_pad)
    wb_bytes = (sum(int(w.size) * jnp.dtype(w.dtype).itemsize for w in weights_pad)
                + sum(int(b.size) * jnp.dtype(b.dtype).itemsize for b in biases_pad))

    def vmem_estimate(t):
        # double-buffered input / output tiles
        act = 2 * x_item * t * in_dim + 2 * o_item * t * out_pad
        # live f32 intermediate activations between layers (spill vregs->VMEM)
        inter = 2 * 4 * t * max_cols
        # weights + biases are single-buffered (pl.Buffered(1), grid-invariant)
        return act + inter + wb_bytes

    # --- token-axis tiling: keep M_pad-M small, >=2 grid steps for v7x's 2 TCs
    min_tiles = 2 if M > 8 else 1
    n_tiles = max(min_tiles, _cdiv(M, tm_max))
    tm = _round_up(_cdiv(M, n_tiles), 8)
    while tm > 8 and vmem_estimate(tm) > budget:
        n_tiles *= 2
        tm = _round_up(_cdiv(M, n_tiles), 8)

    grid_n = _cdiv(M, tm)
    M_pad = grid_n * tm
    x_pad = x2 if M_pad == M else jnp.pad(x2, ((0, M_pad - M), (0, 0)))

    in_specs = [pl.BlockSpec((tm, in_dim), lambda i: (i, 0))]
    operands = [x_pad]
    for w, b in zip(weights_pad, biases_pad):
        kin, kout = int(w.shape[0]), int(w.shape[1])
        # Grid-invariant operands: single-buffered, fetched once.
        in_specs.append(pl.BlockSpec((kin, kout), lambda i: (0, 0),
                                     pipeline_mode=pl.Buffered(1)))
        in_specs.append(pl.BlockSpec((1, kout), lambda i: (0, 0),
                                     pipeline_mode=pl.Buffered(1)))
        operands.append(w)
        operands.append(b)

    kernel = functools.partial(
        _fused_mlp_kernel,
        num_layers=num_layers,
        sigmoid_output=sigmoid_output,
        compute_dtype=compute_dtype,
    )

    vmem_limit = int(min(vmem_cap,
                         max(budget, vmem_estimate(tm)) + 16 * 1024 * 1024))

    out = pl.pallas_call(
        kernel,
        out_shape=jax.ShapeDtypeStruct((M_pad, out_pad), out_dtype),
        grid_spec=pltpu.PrefetchScalarGridSpec(
            num_scalar_prefetch=0,
            grid=(grid_n,),
            in_specs=in_specs,
            out_specs=pl.BlockSpec((tm, out_pad), lambda i: (i, 0)),
        ),
        compiler_params=pltpu.CompilerParams(
            dimension_semantics=("parallel",),
            vmem_limit_bytes=vmem_limit,
        ),
    )(*operands)

    return out[:M, :out_dim]


class MLPPallas:
    """Mirror of the PyTorch MLP module; whole forward pass = one Pallas kernel."""

    def __init__(self, input_dim, hidden_dim, output_dim, num_layers,
                 sigmoid_output=False, key=None, compute_dtype=jnp.bfloat16):
        self.num_layers = num_layers
        self.sigmoid_output = sigmoid_output
        self.output_dim = output_dim
        self.compute_dtype = compute_dtype

        h = [hidden_dim] * (num_layers - 1)
        dims_in = [input_dim] + h
        dims_out = h + [output_dim]

        if key is None:
            key = jax.random.PRNGKey(0)

        self.weights_t = []      # unpadded transposed (in, out), f32 -- reference
        self.biases = []         # unpadded (out,), f32
        self.weights_pad = []    # (in_rows, out_pad) in compute_dtype (bf16)
        self.biases_pad = []     # (1, out_pad) f32
        for idx, (n_in, n_out) in enumerate(zip(dims_in, dims_out)):
            key, kw, kb = jax.random.split(key, 3)
            bound = 1.0 / (n_in ** 0.5)   # PyTorch Linear default uniform bound
            w = jax.random.uniform(kw, (n_out, n_in), jnp.float32, -bound, bound)
            b = jax.random.uniform(kb, (n_out,), jnp.float32, -bound, bound)
            self.weights_t.append(w.T)
            self.biases.append(b)

            # Layer 0 contraction dim stays unpadded (full-extent BlockSpec is
            # legal; padding K only multiplies MXU passes). Later layers' K has
            # to match the previous layer's padded output width.
            in_rows = n_in if idx == 0 else _round_up(n_in, 128)
            out_cols = _round_up(n_out, 128)
            wt_pad = jnp.zeros((in_rows, out_cols), compute_dtype)
            wt_pad = wt_pad.at[:n_in, :n_out].set(w.T.astype(compute_dtype))
            # Biases stay f32: negligible bytes, keeps the f32 epilogue exact.
            b_pad = jnp.zeros((1, out_cols), jnp.float32)
            b_pad = b_pad.at[0, :n_out].set(b)
            self.weights_pad.append(wt_pad)
            self.biases_pad.append(b_pad)

    def __call__(self, x):
        orig_shape = x.shape
        x2 = x.reshape(-1, orig_shape[-1])
        out2 = fused_mlp(
            x2, self.weights_pad, self.biases_pad,
            self.output_dim, self.sigmoid_output,
            compute_dtype=self.compute_dtype,
        )
        return out2.reshape(orig_shape[:-1] + (self.output_dim,))


def _reference_mlp_f32(mlp: MLPPallas, x):
    """Pure-JAX f32 reference: exactly the torch MLP.forward math."""
    orig_shape = x.shape
    x2 = x.reshape(-1, orig_shape[-1])
    for i, (w_t, b) in enumerate(zip(mlp.weights_t, mlp.biases)):
        x2 = x2 @ w_t + b
        if i < mlp.num_layers - 1:
            x2 = jnp.maximum(x2, 0.0)
    if mlp.sigmoid_output:
        x2 = jax.nn.sigmoid(x2)
    return x2.reshape(orig_shape[:-1] + (x2.shape[-1],))


def _reference_mlp_kernel_numerics(mlp: MLPPallas, x):
    """Pure-JAX reference mimicking the kernel's numerics: compute_dtype matmul
    inputs, f32 accumulation + bias, tanh-based sigmoid."""
    cd = mlp.compute_dtype
    orig_shape = x.shape
    h = x.reshape(-1, orig_shape[-1]).astype(jnp.float32)
    for i, (w_t, b) in enumerate(zip(mlp.weights_t, mlp.biases)):
        y = jnp.dot(h.astype(cd), w_t.astype(cd),
                    preferred_element_type=jnp.float32) + b
        h = jnp.maximum(y, 0.0) if i < mlp.num_layers - 1 else y
    if mlp.sigmoid_output:
        h = 0.5 * (jnp.tanh(0.5 * h) + 1.0)
    return h.reshape(orig_shape[:-1] + (h.shape[-1],))


if __name__ == "__main__":
    key = jax.random.PRNGKey(0)
    k_x, k_p = jax.random.split(key)

    # Small shapes consistent with the module: x is [batch, tokens, input_dim]
    batch, tokens = 2, 8
    input_dim, hidden_dim, output_dim, num_layers = 32, 64, 16, 3

    x = jax.random.normal(k_x, (batch, tokens, input_dim), jnp.float32)

    mlp = MLPPallas(input_dim, hidden_dim, output_dim, num_layers,
                    sigmoid_output=True, key=k_p,
                    compute_dtype=jnp.bfloat16)   # bf16 MXU path, f32 accum

    out = mlp(x)
    out = jax.block_until_ready(out)
    assert out.shape == (batch, tokens, output_dim), out.shape

    # Tight check against a pure-JAX reference with the same bf16 numerics.
    ref_bf16 = _reference_mlp_kernel_numerics(mlp, x)
    assert jnp.allclose(out, ref_bf16, atol=2e-3, rtol=2e-3), \
        "mismatch vs bf16-numerics reference"

    # Sanity check against the full-f32 PyTorch-equivalent math (sigmoid output
    # is bounded in [0,1]; bf16 weight rounding accounts for the slack).
    ref_f32 = _reference_mlp_f32(mlp, x)
    assert jnp.allclose(out, ref_f32, atol=6e-2, rtol=6e-2), \
        "mismatch vs f32 reference"

    print("KERNEL_OK")
</pallas_src>

<mosaic_0001>
module attributes {stable_mosaic.version = 11 : i64} {
  func.func @_fused_mlp_kernel(%arg0: i32, %arg1: memref<8x32xf32, #tpu.memory_space<vmem>>, %arg2: memref<32x128xbf16, #tpu.memory_space<vmem>>, %arg3: memref<1x128xf32, #tpu.memory_space<vmem>>, %arg4: memref<128x128xbf16, #tpu.memory_space<vmem>>, %arg5: memref<1x128xf32, #tpu.memory_space<vmem>>, %arg6: memref<128x128xbf16, #tpu.memory_space<vmem>>, %arg7: memref<1x128xf32, #tpu.memory_space<vmem>>, %arg8: memref<8x128xf32, #tpu.memory_space<vmem>>) attributes {dimension_semantics = [#tpu.dimension_semantics<parallel>], iteration_bounds = array<i64: 2>, scalar_prefetch = 0 : i64, scratch_operands = 0 : i64, tpu.core_type = #tpu.core_type<tc>, window_params = [{transform_indices = @transform_0, window_bounds = array<i64: 8, 32>}, {pipeline_mode = #tpu.pipeline_mode<synchronous>, transform_indices = @transform_1, window_bounds = array<i64: 32, 128>}, {pipeline_mode = #tpu.pipeline_mode<synchronous>, transform_indices = @transform_2, window_bounds = array<i64: 1, 128>}, {pipeline_mode = #tpu.pipeline_mode<synchronous>, transform_indices = @transform_3, window_bounds = array<i64: 128, 128>}, {pipeline_mode = #tpu.pipeline_mode<synchronous>, transform_indices = @transform_4, window_bounds = array<i64: 1, 128>}, {pipeline_mode = #tpu.pipeline_mode<synchronous>, transform_indices = @transform_5, window_bounds = array<i64: 128, 128>}, {pipeline_mode = #tpu.pipeline_mode<synchronous>, transform_indices = @transform_6, window_bounds = array<i64: 1, 128>}, {transform_indices = @transform_7, window_bounds = array<i64: 8, 128>}]} {
    %c0 = arith.constant 0 : index
    %c0_0 = arith.constant 0 : index
    %0 = vector.load %arg1[%c0, %c0_0] : memref<8x32xf32, #tpu.memory_space<vmem>>, vector<8x32xf32>
    %c0_1 = arith.constant 0 : index
    %c0_2 = arith.constant 0 : index
    %1 = vector.load %arg2[%c0_1, %c0_2] : memref<32x128xbf16, #tpu.memory_space<vmem>>, vector<32x128xbf16>
    %c0_3 = arith.constant 0 : index
    %c0_4 = arith.constant 0 : index
    %2 = vector.load %arg3[%c0_3, %c0_4] : memref<1x128xf32, #tpu.memory_space<vmem>>, vector<1x128xf32>
    %3 = arith.truncf %0 : vector<8x32xf32> to vector<8x32xbf16>
    %cst = arith.constant dense<0.000000e+00> : vector<8x128xf32>
    %4 = tpu.matmul %3, %1, %cst {dimension_numbers = #tpu.dot_dimension_numbers<[1], [0], [0], [1], [0, 0, 1, 1], [], []>} : vector<8x32xbf16>, vector<32x128xbf16>, vector<8x128xf32> -> vector<8x128xf32>
    %5 = vector.broadcast %2 : vector<1x128xf32> to vector<8x128xf32>
    %6 = arith.addf %4, %5 : vector<8x128xf32>
    %cst_5 = arith.constant 0.000000e+00 : f32
    %7 = vector.broadcast %cst_5 : f32 to vector<8x128xf32>
    %8 = arith.maximumf %6, %7 : vector<8x128xf32>
    %c0_6 = arith.constant 0 : index
    %c0_7 = arith.constant 0 : index
    %9 = vector.load %arg4[%c0_6, %c0_7] : memref<128x128xbf16, #tpu.memory_space<vmem>>, vector<128x128xbf16>
    %c0_8 = arith.constant 0 : index
    %c0_9 = arith.constant 0 : index
    %10 = vector.load %arg5[%c0_8, %c0_9] : memref<1x128xf32, #tpu.memory_space<vmem>>, vector<1x128xf32>
    %11 = arith.truncf %8 : vector<8x128xf32> to vector<8x128xbf16>
    %cst_10 = arith.constant dense<0.000000e+00> : vector<8x128xf32>
    %12 = tpu.matmul %11, %9, %cst_10 {dimension_numbers = #tpu.dot_dimension_numbers<[1], [0], [0], [1], [0, 0, 1, 1], [], []>} : vector<8x128xbf16>, vector<128x128xbf16>, vector<8x128xf32> -> vector<8x128xf32>
    %13 = vector.broadcast %10 : vector<1x128xf32> to vector<8x128xf32>
    %14 = arith.addf %12, %13 : vector<8x128xf32>
    %cst_11 = arith.constant 0.000000e+00 : f32
    %15 = vector.broadcast %cst_11 : f32 to vector<8x128xf32>
    %16 = arith.maximumf %14, %15 : vector<8x128xf32>
    %c0_12 = arith.constant 0 : index
    %c0_13 = arith.constant 0 : index
    %17 = vector.load %arg6[%c0_12, %c0_13] : memref<128x128xbf16, #tpu.memory_space<vmem>>, vector<128x128xbf16>
    %c0_14 = arith.constant 0 : index
    %c0_15 = arith.constant 0 : index
    %18 = vector.load %arg7[%c0_14, %c0_15] : memref<1x128xf32, #tpu.memory_space<vmem>>, vector<1x128xf32>
    %19 = arith.truncf %16 : vector<8x128xf32> to vector<8x128xbf16>
    %cst_16 = arith.constant dense<0.000000e+00> : vector<8x128xf32>
    %20 = tpu.matmul %19, %17, %cst_16 {dimension_numbers = #tpu.dot_dimension_numbers<[1], [0], [0], [1], [0, 0, 1, 1], [], []>} : vector<8x128xbf16>, vector<128x128xbf16>, vector<8x128xf32> -> vector<8x128xf32>
    %21 = vector.broadcast %18 : vector<1x128xf32> to vector<8x128xf32>
    %22 = arith.addf %20, %21 : vector<8x128xf32>
    %cst_17 = arith.constant 5.000000e-01 : f32
    %23 = vector.broadcast %cst_17 : f32 to vector<8x128xf32>
    %24 = arith.mulf %23, %22 : vector<8x128xf32>
    %25 = math.tanh %24 : vector<8x128xf32>
    %cst_18 = arith.constant 1.000000e+00 : f32
    %26 = vector.broadcast %cst_18 : f32 to vector<8x128xf32>
    %27 = arith.addf %25, %26 : vector<8x128xf32>
    %cst_19 = arith.constant 5.000000e-01 : f32
    %28 = vector.broadcast %cst_19 : f32 to vector<8x128xf32>
    %29 = arith.mulf %28, %27 : vector<8x128xf32>
    %c0_20 = arith.constant 0 : index
    %c0_21 = arith.constant 0 : index
    %30 = vector.load %arg8[%c0_20, %c0_21] : memref<8x128xf32, #tpu.memory_space<vmem>>, vector<8x128xf32>
    tpu.vector_store %arg8[%c0_20, %c0_21], %29 {strides = array<i32>} : memref<8x128xf32, #tpu.memory_space<vmem>>, vector<8x128xf32>,
    return
  }
  func.func @transform_0(%arg0: i32) -> (i32, i32) {
    %c0_i32 = arith.constant 0 : i32
    %c0_i32_0 = arith.constant 0 : i32
    return %arg0, %c0_i32 : i32, i32
  }
  func.func @transform_1(%arg0: i32) -> (i32, i32) {
    %c0_i32 = arith.constant 0 : i32
    %c0_i32_0 = arith.constant 0 : i32
    %c0_i32_1 = arith.constant 0 : i32
    return %c0_i32, %c0_i32_0 : i32, i32
  }
  func.func @transform_2(%arg0: i32) -> (i32, i32) {
    %c0_i32 = arith.constant 0 : i32
    %c0_i32_0 = arith.constant 0 : i32
    %c0_i32_1 = arith.constant 0 : i32
    return %c0_i32, %c0_i32_0 : i32, i32
  }
  func.func @transform_3(%arg0: i32) -> (i32, i32) {
    %c0_i32 = arith.constant 0 : i32
    %c0_i32_0 = arith.constant 0 : i32
    %c0_i32_1 = arith.constant 0 : i32
    return %c0_i32, %c0_i32_0 : i32, i32
  }
  func.func @transform_4(%arg0: i32) -> (i32, i32) {
    %c0_i32 = arith.constant 0 : i32
    %c0_i32_0 = arith.constant 0 : i32
    %c0_i32_1 = arith.constant 0 : i32
    return %c0_i32, %c0_i32_0 : i32, i32
  }
  func.func @transform_5(%arg0: i32) -> (i32, i32) {
    %c0_i32 = arith.constant 0 : i32
    %c0_i32_0 = arith.constant 0 : i32
    %c0_i32_1 = arith.constant 0 : i32
    return %c0_i32, %c0_i32_0 : i32, i32
  }
  func.func @transform_6(%arg0: i32) -> (i32, i32) {
    %c0_i32 = arith.constant 0 : i32
    %c0_i32_0 = arith.constant 0 : i32
    %c0_i32_1 = arith.constant 0 : i32
    return %c0_i32, %c0_i32_0 : i32, i32
  }
  func.func @transform_7(%arg0: i32) -> (i32, i32) {
    %c0_i32 = arith.constant 0 : i32
    %c0_i32_0 = arith.constant 0 : i32
    return %arg0, %c0_i32 : i32, i32
  }
}

</mosaic_0001>

<llo_original>
// kernel: tpu_custom_call.1
$region0: #{tpu_custom_call.1}
  #allocation0 [shape = 'u32[]', space=smem, size = 0x4, offset = 0x4, fixed_abs, tag = 'smem constant byte address 0x4 - core index']
  #allocation1 [shape = 'u32[144,128]{1,0:T(1,128)}', space=vmem, size = 0x12000, scoped, tag = 'internal scratch']
  %s0 = inlined_call_operand.hbm [shape: f32[16,32], index: 0, kind: input, shape index: {}]
  %s1 = inlined_call_operand.hbm [shape: bf16[32,128], index: 1, kind: input, shape index: {}]
  %s2 = inlined_call_operand.vmem [shape: f32[1,128], index: 2, kind: input, shape index: {}]
  %s3 = inlined_call_operand.hbm [shape: bf16[128,128], index: 3, kind: input, shape index: {}]
  %s4 = inlined_call_operand.vmem [shape: f32[1,128], index: 4, kind: input, shape index: {}]
  %s5 = inlined_call_operand.hbm [shape: bf16[128,128], index: 5, kind: input, shape index: {}]
  %s6 = inlined_call_operand.vmem [shape: f32[1,128], index: 6, kind: input, shape index: {}]
  %s7 = inlined_call_operand.hbm [shape: f32[16,128], index: 7, kind: output, shape index: {}]
  %s8 = sld [smem:[#allocation0]]
  $region77: #{tpu_custom_call.1} parent=0
    _
  %s10 = ssub.s32 1, %s8
  %s11 = scalar_select 0, %s10, %s8
  $region1: #{tpu_custom_call.1} parent=0
    #allocation2 [shape = 'u8[8192]{0}', space=vmem, size = 0x2000, scoped, tag = 'input window, operand 0']
    #allocation3 [shape = 's32[2]{0}', space=sflag, size = 0x8, scoped, tag = 'scoped memory for tpu_custom_call.1']
    #allocation4 [shape = 's32[2]{0}', space=sflag, size = 0x8, scoped, tag = 'scoped memory for tpu_custom_call.1']
    #allocation5 [shape = 'u8[8192]{0}', space=vmem, size = 0x2000, scoped, tag = 'input window, operand 1, single buffered']
    #allocation6 [shape = 's32[1]{0}', space=sflag, size = 0x4, scoped, tag = 'scoped memory for tpu_custom_call.1']
    #allocation7 [shape = 'u8[32768]{0}', space=vmem, size = 0x8000, scoped, tag = 'input window, operand 3, single buffered']
    #allocation8 [shape = 'u8[32768]{0}', space=vmem, size = 0x8000, scoped, tag = 'input window, operand 5, single buffered']
    #allocation9 [shape = 's32[1]{0}', space=sflag, size = 0x4, scoped, tag = 'scoped memory for tpu_custom_call.1']
    #allocation10 [shape = 'u8[8192]{0}', space=vmem, size = 0x2000, scoped, tag = 'output window, operand 0']
    %12 = vsyncpa [#allocation3], 0
    %s13 = scalar_lea.sflag [#allocation3], 1
    %14 = vsyncpa %s13, 0
    %15 = vsyncpa [#allocation6], 0
    %16 = vsyncpa [#allocation9], 0
    %17 = vsyncpa [#allocation4], 0
    %s18 = scalar_lea.sflag [#allocation4], 1
    %19 = vsyncpa %s18, 0
    loop: start=0, step=1, limit=4
    $region2: #{tpu_custom_call.1} parent=1 // loop_pre_header
      _
    $region3: #{tpu_custom_call.1} parent=1 // loop_header
      %s21 = sphi 0, %s25
      %p22 = scmp.ge.s32.totalorder %s21, 4
      %s31 = sphi 0, %s33
      %s34 = sphi 0, %s31
      %s35 = sphi 0, %s34
      %s51 = sphi 0, %s35
      %s55 = sphi 0, %s55
      %s57 = sphi 0, %s55
      %s58 = sphi 0, %s57
      %s72 = sphi 0, %s58
      %s76 = sphi 0, %s76
      %s78 = sphi 0, %s76
      %s79 = sphi 0, %s78
      %s93 = sphi 0, %s79
      %s97 = sphi 0, %s97
      %s99 = sphi 0, %s97
      %s100 = sphi 0, %s99
      %s114 = sphi 0, %s100
      %s118 = sphi 0, %s118
      %s120 = sphi 0, %s118
      %s121 = sphi 0, %s120
      %s135 = sphi 0, %s121
      %s139 = sphi 0, %s139
      %s141 = sphi 0, %s139
      %s142 = sphi 0, %s141
      %s156 = sphi 0, %s142
      %s160 = sphi 0, %s160
      %s162 = sphi 0, %s160
      %s163 = sphi 0, %s162
      %s177 = sphi 0, %s163
      %s183 = sphi 0, %s185
      %s186 = sphi 0, %s183
      %s187 = sphi 0, %s186
      %s203 = sphi 0, %s187
    $region4: #{tpu_custom_call.1} parent=1 // loop_header_branch
      %24 = sbr.rel (%p22) target = $region8
    $region5: #{tpu_custom_call.1} parent=1 // loop_body
      %s26 = ssub.s32 %s21, 1
      %s27 = ssub.s32 %s21, 2
      %s28 = sadd.s32 %s21, 1
      %s29 = ssub.s32 %s21, %s28
      %p30 = scmp.eq.s32.totalorder %s29, 0
      %s32 = sadd.s32 %s31, 1
      %s33 = scalar_select %p30, %s31, %s32
      %p36 = pneg %p30
      %p37 = scmp.eq.s32.totalorder %s21, 1
      %p38 = por %p36, %p37
      %p39 = scmp.ne.s32.totalorder %s31, %s34
      %p40 = scmp.eq.s32.totalorder %s21, 0
      %p41 = por %p39, %p40
      %p42 = scmp.ne.s32.totalorder %s31, %s34
      %p43 = scmp.eq.s32.totalorder %s26, 1
      %p44 = por %p42, %p43
      %p45 = scmp.ne.s32.totalorder %s34, %s35
      %p46 = scmp.eq.s32.totalorder %s26, 0
      %p47 = por %p45, %p46
      %p48 = scmp.ne.s32.totalorder %s34, %s35
      %p49 = scmp.eq.s32.totalorder %s27, 1
      %p50 = por %p48, %p49
      %p52 = scmp.ne.s32.totalorder %s35, %s51
      %p53 = scmp.eq.s32.totalorder %s27, 0
      %p54 = por %p52, %p53
      %s56 = sadd.s32 %s55, 1
      %p59 = scmp.eq.s32.totalorder %s21, 1
      %p60 = scmp.ne.s32.totalorder %s55, %s57
      %p61 = scmp.eq.s32.totalorder %s21, 0
      %p62 = por %p60, %p61
      %p63 = scmp.ne.s32.totalorder %s55, %s57
      %p64 = scmp.eq.s32.totalorder %s26, 1
      %p65 = por %p63, %p64
      %p66 = scmp.ne.s32.totalorder %s57, %s58
      %p67 = scmp.eq.s32.totalorder %s26, 0
      %p68 = por %p66, %p67
      %p69 = scmp.ne.s32.totalorder %s57, %s58
      %p70 = scmp.eq.s32.totalorder %s27, 1
      %p71 = por %p69, %p70
      %p73 = scmp.ne.s32.totalorder %s58, %s72
      %p74 = scmp.eq.s32.totalorder %s27, 0
      %p75 = por %p73, %p74
      %s77 = sadd.s32 %s76, 1
      %p80 = scmp.eq.s32.totalorder %s21, 1
      %p81 = scmp.ne.s32.totalorder %s76, %s78
      %p82 = scmp.eq.s32.totalorder %s21, 0
      %p83 = por %p81, %p82
      %p84 = scmp.ne.s32.totalorder %s76, %s78
      %p85 = scmp.eq.s32.totalorder %s26, 1
      %p86 = por %p84, %p85
      %p87 = scmp.ne.s32.totalorder %s78, %s79
      %p88 = scmp.eq.s32.totalorder %s26, 0
      %p89 = por %p87, %p88
      %p90 = scmp.ne.s32.totalorder %s78, %s79
      %p91 = scmp.eq.s32.totalorder %s27, 1
      %p92 = por %p90, %p91
      %p94 = scmp.ne.s32.totalorder %s79, %s93
      %p95 = scmp.eq.s32.totalorder %s27, 0
      %p96 = por %p94, %p95
      %s98 = sadd.s32 %s97, 1
      %p101 = scmp.eq.s32.totalorder %s21, 1
      %p102 = scmp.ne.s32.totalorder %s97, %s99
      %p103 = scmp.eq.s32.totalorder %s21, 0
      %p104 = por %p102, %p103
      %p105 = scmp.ne.s32.totalorder %s97, %s99
      %p106 = scmp.eq.s32.totalorder %s26, 1
      %p107 = por %p105, %p106
      %p108 = scmp.ne.s32.totalorder %s99, %s100
      %p109 = scmp.eq.s32.totalorder %s26, 0
      %p110 = por %p108, %p109
      %p111 = scmp.ne.s32.totalorder %s99, %s100
      %p112 = scmp.eq.s32.totalorder %s27, 1
      %p113 = por %p111, %p112
      %p115 = scmp.ne.s32.totalorder %s100, %s114
      %p116 = scmp.eq.s32.totalorder %s27, 0
      %p117 = por %p115, %p116
      %s119 = sadd.s32 %s118, 1
      %p122 = scmp.eq.s32.totalorder %s21, 1
      %p123 = scmp.ne.s32.totalorder %s118, %s120
      %p124 = scmp.eq.s32.totalorder %s21, 0
      %p125 = por %p123, %p124
      %p126 = scmp.ne.s32.totalorder %s118, %s120
      %p127 = scmp.eq.s32.totalorder %s26, 1
      %p128 = por %p126, %p127
      %p129 = scmp.ne.s32.totalorder %s120, %s121
      %p130 = scmp.eq.s32.totalorder %s26, 0
      %p131 = por %p129, %p130
      %p132 = scmp.ne.s32.totalorder %s120, %s121
      %p133 = scmp.eq.s32.totalorder %s27, 1
      %p134 = por %p132, %p133
      %p136 = scmp.ne.s32.totalorder %s121, %s135
      %p137 = scmp.eq.s32.totalorder %s27, 0
      %p138 = por %p136, %p137
      %s140 = sadd.s32 %s139, 1
      %p143 = scmp.eq.s32.totalorder %s21, 1
      %p144 = scmp.ne.s32.totalorder %s139, %s141
      %p145 = scmp.eq.s32.totalorder %s21, 0
      %p146 = por %p144, %p145
      %p147 = scmp.ne.s32.totalorder %s139, %s141
      %p148 = scmp.eq.s32.totalorder %s26, 1
      %p149 = por %p147, %p148
      %p150 = scmp.ne.s32.totalorder %s141, %s142
      %p151 = scmp.eq.s32.totalorder %s26, 0
      %p152 = por %p150, %p151
      %p153 = scmp.ne.s32.totalorder %s141, %s142
      %p154 = scmp.eq.s32.totalorder %s27, 1
      %p155 = por %p153, %p154
      %p157 = scmp.ne.s32.totalorder %s142, %s156
      %p158 = scmp.eq.s32.totalorder %s27, 0
      %p159 = por %p157, %p158
      %s161 = sadd.s32 %s160, 1
      %p164 = scmp.eq.s32.totalorder %s21, 1
      %p165 = scmp.ne.s32.totalorder %s160, %s162
      %p166 = scmp.eq.s32.totalorder %s21, 0
      %p167 = por %p165, %p166
      %p168 = scmp.ne.s32.totalorder %s160, %s162
      %p169 = scmp.eq.s32.totalorder %s26, 1
      %p170 = por %p168, %p169
      %p171 = scmp.ne.s32.totalorder %s162, %s163
      %p172 = scmp.eq.s32.totalorder %s26, 0
      %p173 = por %p171, %p172
      %p174 = scmp.ne.s32.totalorder %s162, %s163
      %p175 = scmp.eq.s32.totalorder %s27, 1
      %p176 = por %p174, %p175
      %p178 = scmp.ne.s32.totalorder %s163, %s177
      %p179 = scmp.eq.s32.totalorder %s27, 0
      %p180 = por %p178, %p179
      %s181 = ssub.s32 %s21, %s28
      %p182 = scmp.eq.s32.totalorder %s181, 0
      %s184 = sadd.s32 %s183, 1
      %s185 = scalar_select %p182, %s183, %s184
      %p188 = pneg %p182
      %p189 = scmp.eq.s32.totalorder %s21, 1
      %p190 = por %p188, %p189
      %p191 = scmp.ne.s32.totalorder %s183, %s186
      %p192 = scmp.eq.s32.totalorder %s21, 0
      %p193 = por %p191, %p192
      %p194 = scmp.ne.s32.totalorder %s183, %s186
      %p195 = scmp.eq.s32.totalorder %s26, 1
      %p196 = por %p194, %p195
      %p197 = scmp.ne.s32.totalorder %s186, %s187
      %p198 = scmp.eq.s32.totalorder %s26, 0
      %p199 = por %p197, %p198
      %p200 = scmp.ne.s32.totalorder %s186, %s187
      %p201 = scmp.eq.s32.totalorder %s27, 1
      %p202 = por %p200, %p201
      %p204 = scmp.ne.s32.totalorder %s187, %s203
      %p205 = scmp.eq.s32.totalorder %s27, 0
      %p206 = por %p204, %p205
      %p207 = scmp.le.s32.totalorder 1, %s21
      %p208 = scmp.lt.s32.totalorder %s21, 3
      %p209 = pnand %p207, %p208
      %p210 = pneg %p209
      // Predicated region
      $region9: #{tpu_custom_call.1} parent=5 // pred_check
        _
      $region10: #{tpu_custom_call.1} parent=5 // pred_check_branch
        %212 = sbr.rel (%p209) target = $region12
      $region11: #{tpu_custom_call.1} parent=5 // pred_region
        %s213 = ssub.s32 %s21, 1
        // Predicated region
        $region13: #{tpu_custom_call.1} parent=11 // pred_check
          %p214 = pneg %p68
        $region14: #{tpu_custom_call.1} parent=11 // pred_check_branch
          %216 = sbr.rel (%p214) target = $region16
        $region15: #{tpu_custom_call.1} parent=11 // pred_region
          %s218 = ssub.s32 256, 256
          %219 = vsyncadd [#allocation6], %s218
          %s220 = sshll.u32 [#allocation5], 4
          %s221 = int_to_ptr.vmem [resolvable:$true] %s220
          %226 = dma.hbm_to_vmem [thread:$0]  %s1, 256, %s221, [#allocation6], 64, 64, 4
        $region16: #{tpu_custom_call.1} parent=11 // pred_fallthru
          _
        // Predicated region
        $region17: #{tpu_custom_call.1} parent=11 // pred_check
          %p227 = pneg %p89
        $region18: #{tpu_custom_call.1} parent=11 // pred_check_branch
          %229 = sbr.rel (%p227) target = $region20
        $region19: #{tpu_custom_call.1} parent=11 // pred_region
          _
        $region20: #{tpu_custom_call.1} parent=11 // pred_fallthru
          _
        // Predicated region
        $region21: #{tpu_custom_call.1} parent=11 // pred_check
          %p230 = pneg %p110
        $region22: #{tpu_custom_call.1} parent=11 // pred_check_branch
          %232 = sbr.rel (%p230) target = $region24
        $region23: #{tpu_custom_call.1} parent=11 // pred_region
          %s234 = ssub.s32 1024, 1024
          %235 = vsyncadd [#allocation6], %s234
          %s236 = sshll.u32 [#allocation7], 4
          %s237 = int_to_ptr.vmem [resolvable:$true] %s236
          %242 = dma.hbm_to_vmem [thread:$0]  %s3, 1024, %s237, [#allocation6], 64, 64, 4
        $region24: #{tpu_custom_call.1} parent=11 // pred_fallthru
          _
        // Predicated region
        $region25: #{tpu_custom_call.1} parent=11 // pred_check
          %p243 = pneg %p131
        $region26: #{tpu_custom_call.1} parent=11 // pred_check_branch
          %245 = sbr.rel (%p243) target = $region28
        $region27: #{tpu_custom_call.1} parent=11 // pred_region
          _
        $region28: #{tpu_custom_call.1} parent=11 // pred_fallthru
          _
        // Predicated region
        $region29: #{tpu_custom_call.1} parent=11 // pred_check
          %p246 = pneg %p152
        $region30: #{tpu_custom_call.1} parent=11 // pred_check_branch
          %248 = sbr.rel (%p246) target = $region32
        $region31: #{tpu_custom_call.1} parent=11 // pred_region
          %s250 = ssub.s32 1024, 1024
          %251 = vsyncadd [#allocation9], %s250
          %s252 = sshll.u32 [#allocation8], 4
          %s253 = int_to_ptr.vmem [resolvable:$true] %s252
          %258 = dma.hbm_to_vmem [thread:$0]  %s5, 1024, %s253, [#allocation9], 64, 64, 4
        $region32: #{tpu_custom_call.1} parent=11 // pred_fallthru
          _
        // Predicated region
        $region33: #{tpu_custom_call.1} parent=11 // pred_check
          %p259 = pneg %p173
        $region34: #{tpu_custom_call.1} parent=11 // pred_check_branch
          %261 = sbr.rel (%p259) target = $region36
        $region35: #{tpu_custom_call.1} parent=11 // pred_region
          _
        $region36: #{tpu_custom_call.1} parent=11 // pred_fallthru
          _
      $region12: #{tpu_custom_call.1} parent=5 // pred_fallthru
        _
      %p262 = scmp.lt.s32.totalorder %s21, 2
      // Predicated region
      $region37: #{tpu_custom_call.1} parent=5 // pred_check
        %p263 = pneg %p262
      $region38: #{tpu_custom_call.1} parent=5 // pred_check_branch
        %265 = sbr.rel (%p263) target = $region40
      $region39: #{tpu_custom_call.1} parent=5 // pred_region
        // Predicated region
        $region41: #{tpu_custom_call.1} parent=39 // pred_check
          %p266 = pneg %p41
        $region42: #{tpu_custom_call.1} parent=39 // pred_check_branch
          %268 = sbr.rel (%p266) target = $region44
        $region43: #{tpu_custom_call.1} parent=39 // pred_region
          %s269 = sand.u32 %s31, 1
          %s270 = scalar_lea.sflag [#allocation3], %s269
          %s271 = sand.u32 %s31, 1
          %s272 = smul.addr %s271, 8
          %s273 = scalar_lea.vmem [#allocation2], %s272
          %s275 = ssub.s32 128, 128
          %276 = vsyncadd %s270, %s275
          %s277 = smul.addr %s21, 128
          %s278 = scalar_lea.hbm %s0, %s277
          %s280 = sshll.u32 %s273, 4
          %s281 = int_to_ptr.vmem [resolvable:$true] %s280
          %283 = dma.hbm_to_vmem [thread:$0]  %s278, 128, %s281, %s270
        $region44: #{tpu_custom_call.1} parent=39 // pred_fallthru
          _
      $region40: #{tpu_custom_call.1} parent=5 // pred_fallthru
        _
      %p284 = scmp.le.s32.totalorder 1, %s21
      %p285 = scmp.lt.s32.totalorder %s21, 3
      %p286 = pnand %p284, %p285
      %p287 = pneg %p286
      // Predicated region
      $region45: #{tpu_custom_call.1} parent=5 // pred_check
        _
      $region46: #{tpu_custom_call.1} parent=5 // pred_check_branch
        %289 = sbr.rel (%p286) target = $region48
      $region47: #{tpu_custom_call.1} parent=5 // pred_region
        %s290 = ssub.s32 %s21, 1
        %s291 = sand.u32 %s34, 1
        %s292 = scalar_lea.sflag [#allocation3], %s291
        %s293 = sand.u32 %s34, 1
        %s294 = smul.addr %s293, 8
        %s295 = scalar_lea.vmem [#allocation2], %s294
        // Predicated region
        $region49: #{tpu_custom_call.1} parent=47 // pred_check
          %p296 = pneg %p47
        $region50: #{tpu_custom_call.1} parent=47 // pred_check_branch
          %298 = sbr.rel (%p296) target = $region52
        $region51: #{tpu_custom_call.1} parent=47 // pred_region
          %299 = dma.done %s292, 128
        $region52: #{tpu_custom_call.1} parent=47 // pred_fallthru
          _
        // Predicated region
        $region53: #{tpu_custom_call.1} parent=47 // pred_check
          %p300 = pneg %p68
        $region54: #{tpu_custom_call.1} parent=47 // pred_check_branch
          %302 = sbr.rel (%p300) target = $region56
        $region55: #{tpu_custom_call.1} parent=47 // pred_region
          %303 = dma.done [#allocation6], 256
        $region56: #{tpu_custom_call.1} parent=47 // pred_fallthru
          _
        // Predicated region
        $region57: #{tpu_custom_call.1} parent=47 // pred_check
          %p304 = pneg %p110
        $region58: #{tpu_custom_call.1} parent=47 // pred_check_branch
          %306 = sbr.rel (%p304) target = $region60
        $region59: #{tpu_custom_call.1} parent=47 // pred_region
          %307 = dma.done [#allocation6], 1024
        $region60: #{tpu_custom_call.1} parent=47 // pred_fallthru
          _
        // Predicated region
        $region61: #{tpu_custom_call.1} parent=47 // pred_check
          %p308 = pneg %p152
        $region62: #{tpu_custom_call.1} parent=47 // pred_check_branch
          %310 = sbr.rel (%p308) target = $region64
        $region63: #{tpu_custom_call.1} parent=47 // pred_region
          %311 = dma.done [#allocation9], 1024
        $region64: #{tpu_custom_call.1} parent=47 // pred_fallthru
          _
        %s312 = sand.u32 %s34, 1
        %s313 = scalar_lea.sflag [#allocation3], %s312
        %s314 = sand.u32 %s34, 1
        %s315 = smul.addr %s314, 8
        %s316 = scalar_lea.vmem [#allocation2], %s315
        %p317 = pneg %p47
        %p318 = pneg %p44
        %p319 = pneg %p68
        %p320 = pneg %p65
        %p321 = pneg %p89
        %p322 = pneg %p86
        %p323 = pneg %p110
        %p324 = pneg %p107
        %p325 = pneg %p131
        %p326 = pneg %p128
        %p327 = pneg %p152
        %p328 = pneg %p149
        %p329 = pneg %p173
        %p330 = pneg %p170
        %p331 = pneg %p199
        %p332 = pneg %p196
        %s333 = sand.u32 %s186, 1
        %s334 = scalar_lea.sflag [#allocation4], %s333
        %s335 = sand.u32 %s186, 1
        %s336 = smul.addr %s335, 8
        %s337 = scalar_lea.vmem [#allocation10], %s336
        %v339 = vld [vmem:[%s295] sm:$0xff]
        %v340 = vld [vmem:[#allocation5] sm:$0xf]
        %v341 = vld [vmem:[#allocation5 + $0x4] sm:$0xf]
        %v342 = vld [vmem:[#allocation5 + $0x8] sm:$0xf]
        %v343 = vld [vmem:[#allocation5 + $0xc] sm:$0xf]
        %v344 = vld [vmem:[%s2] sm:$0x1]
        %v345 = vpack.c.bf16 %v339, %v339
        %v347 = vlaneseq
        %v348 = vshrl.u32 %v347, 7
        %v349 = vsub.s32 0, %v348
        %v350 = vrot.slane %v344, %v349
        %v356 = vunpack.c.l.b16 %v340
        %v357 = vunpack.c.l.b16 %v341
        %v358 = vunpack.c.l.b16 %v342
        %v359 = vunpack.c.l.b16 %v343
        %v360 = vpack.c.b16 %v357, %v356
        %v361 = vpack.c.b16 %v359, %v358
        %vm364 = vcmask 261120
        %v366 = vsel %vm364, %v345, 0
        %368 = vmatprep.subr.bf16.mxu0 0
        %369 = vmatpush1.bf16.msra.mxu0 0
        %370 = vmatprep.subr.bf16.mxu0 0
        %371 = vmatpush1.bf16.msra.mxu0 0
        %372 = vmatprep.subr.bf16.mxu0 0
        %373 = vmatpush1.bf16.msra.mxu0 0
        %374 = vmatprep.subr.bf16.mxu0 0
        %375 = vmatpush1.bf16.msra.mxu0 0
        %376 = vmatprep.subr.bf16.mxu0 0
        %377 = vmatpush1.bf16.msra.mxu0 0
        %378 = vmatprep.subr.bf16.mxu0 0
        %379 = vmatpush1.bf16.msra.mxu0 0
        %380 = vmatprep.subr.bf16.mxu0 0
        %381 = vmatpush1.bf16.msra.mxu0 %v361
        %382 = vmatprep.subr.bf16.mxu0 0
        %383 = vmatpush1.bf16.msra.mxu0 %v360
        %384 = vmatprep.subr.bf16.mxu0 0
        %385 = vmatpush2.bf16.msra.mxu0 0
        %386 = vmatprep.subr.bf16.mxu0 0
        %387 = vmatpush2.bf16.msra.mxu0 0
        %388 = vmatprep.subr.bf16.mxu0 0
        %389 = vmatpush2.bf16.msra.mxu0 0
        %390 = vmatprep.subr.bf16.mxu0 0
        %391 = vmatpush2.bf16.msra.mxu0 0
        %392 = vmatprep.subr.bf16.mxu0 0
        %393 = vmatpush2.bf16.msra.mxu0 0
        %394 = vmatprep.subr.bf16.mxu0 0
        %395 = vmatpush2.bf16.msra.mxu0 0
        %396 = vmatprep.subr.bf16.mxu0 0
        %397 = vmatpush2.bf16.msra.mxu0 0
        %398 = vmatprep.subr.bf16.mxu0 0
        %399 = vmatpush2.bf16.msra.mxu0 0
        %400 = vmatprep.mubr.bf16.mxu0 0
        %401 = vmatmul.mubr.bf16.gmra.mxu0 %v366
        %v402 = vpop.f32.mrf.mxu0
        %v403 = vadd.f32 %v350, %v402
        %v404 = vpop.f32.mrf.mxu0
        %v405 = vpop.f32.mrf.mxu0
        %v406 = vpop.f32.mrf.mxu0
        %407 = vdwg.mxu0
        %v408 = vmax.f32 %v403, 0.0
        %v409 = vld [vmem:[#allocation7] sm:$0xf]
        %v410 = vld [vmem:[#allocation7 + $0x4] sm:$0xf]
        %v411 = vld [vmem:[#allocation7 + $0x8] sm:$0xf]
        %v412 = vld [vmem:[#allocation7 + $0xc] sm:$0xf]
        %v413 = vld [vmem:[#allocation7 + $0x10] sm:$0xf]
        %v414 = vld [vmem:[#allocation7 + $0x14] sm:$0xf]
        %v415 = vld [vmem:[#allocation7 + $0x18] sm:$0xf]
        %v416 = vld [vmem:[#allocation7 + $0x1c] sm:$0xf]
        %v417 = vld [vmem:[#allocation7 + $0x20] sm:$0xf]
        %v418 = vld [vmem:[#allocation7 + $0x24] sm:$0xf]
        %v419 = vld [vmem:[#allocation7 + $0x28] sm:$0xf]
        %v420 = vld [vmem:[#allocation7 + $0x2c] sm:$0xf]
        %v421 = vld [vmem:[#allocation7 + $0x30] sm:$0xf]
        %v422 = vld [vmem:[#allocation7 + $0x34] sm:$0xf]
        %v423 = vld [vmem:[#allocation7 + $0x38] sm:$0xf]
        %v424 = vld [vmem:[#allocation7 + $0x3c] sm:$0xf]
        %v425 = vld [vmem:[%s4] sm:$0x1]
        %v426 = vpack.c.bf16 %v408, %v408
        %v428 = vlaneseq
        %v429 = vshrl.u32 %v428, 7
        %v430 = vsub.s32 0, %v429
        %v431 = vrot.slane %v425, %v430
        %v449 = vunpack.c.l.b16 %v409
        %v450 = vunpack.c.l.b16 %v410
        %v451 = vunpack.c.l.b16 %v411
        %v452 = vunpack.c.l.b16 %v412
        %v453 = vunpack.c.l.b16 %v413
        %v454 = vunpack.c.l.b16 %v414
        %v455 = vunpack.c.l.b16 %v415
        %v456 = vunpack.c.l.b16 %v416
        %v457 = vunpack.c.l.b16 %v417
        %v458 = vunpack.c.l.b16 %v418
        %v459 = vunpack.c.l.b16 %v419
        %v460 = vunpack.c.l.b16 %v420
        %v461 = vunpack.c.l.b16 %v421
        %v462 = vunpack.c.l.b16 %v422
        %v463 = vunpack.c.l.b16 %v423
        %v464 = vunpack.c.l.b16 %v424
        %v465 = vpack.c.b16 %v450, %v449
        %v466 = vpack.c.b16 %v452, %v451
        %v467 = vpack.c.b16 %v454, %v453
        %v468 = vpack.c.b16 %v456, %v455
        %v469 = vpack.c.b16 %v458, %v457
        %v470 = vpack.c.b16 %v460, %v459
        %v471 = vpack.c.b16 %v462, %v461
        %v472 = vpack.c.b16 %v464, %v463
        %481 = vmatprep.subr.bf16.mxu0 0
        %482 = vmatpush1.bf16.msra.mxu0 %v472
        %483 = vmatprep.subr.bf16.mxu0 0
        %484 = vmatpush1.bf16.msra.mxu0 %v471
        %485 = vmatprep.subr.bf16.mxu0 0
        %486 = vmatpush1.bf16.msra.mxu0 %v470
        %487 = vmatprep.subr.bf16.mxu0 0
        %488 = vmatpush1.bf16.msra.mxu0 %v469
        %489 = vmatprep.subr.bf16.mxu0 0
        %490 = vmatpush1.bf16.msra.mxu0 %v468
        %491 = vmatprep.subr.bf16.mxu0 0
        %492 = vmatpush1.bf16.msra.mxu0 %v467
        %493 = vmatprep.subr.bf16.mxu0 0
        %494 = vmatpush1.bf16.msra.mxu0 %v466
        %495 = vmatprep.subr.bf16.mxu0 0
        %496 = vmatpush1.bf16.msra.mxu0 %v465
        %497 = vmatprep.subr.bf16.mxu0 0
        %498 = vmatpush2.bf16.msra.mxu0 0
        %499 = vmatprep.subr.bf16.mxu0 0
        %500 = vmatpush2.bf16.msra.mxu0 0
        %501 = vmatprep.subr.bf16.mxu0 0
        %502 = vmatpush2.bf16.msra.mxu0 0
        %503 = vmatprep.subr.bf16.mxu0 0
        %504 = vmatpush2.bf16.msra.mxu0 0
        %505 = vmatprep.subr.bf16.mxu0 0
        %506 = vmatpush2.bf16.msra.mxu0 0
        %507 = vmatprep.subr.bf16.mxu0 0
        %508 = vmatpush2.bf16.msra.mxu0 0
        %509 = vmatprep.subr.bf16.mxu0 0
        %510 = vmatpush2.bf16.msra.mxu0 0
        %511 = vmatprep.subr.bf16.mxu0 0
        %512 = vmatpush2.bf16.msra.mxu0 0
        %513 = vmatprep.mubr.bf16.mxu0 0
        %514 = vmatmul.mubr.bf16.gmra.mxu0 %v426
        %v515 = vpop.f32.mrf.mxu0
        %v516 = vadd.f32 %v431, %v515
        %v517 = vpop.f32.mrf.mxu0
        %v518 = vpop.f32.mrf.mxu0
        %v519 = vpop.f32.mrf.mxu0
        %520 = vdwg.mxu0
        %v521 = vmax.f32 %v516, 0.0
        %v522 = vld [vmem:[#allocation8] sm:$0xf]
        %v523 = vld [vmem:[#allocation8 + $0x4] sm:$0xf]
        %v524 = vld [vmem:[#allocation8 + $0x8] sm:$0xf]
        %v525 = vld [vmem:[#allocation8 + $0xc] sm:$0xf]
        %v526 = vld [vmem:[#allocation8 + $0x10] sm:$0xf]
        %v527 = vld [vmem:[#allocation8 + $0x14] sm:$0xf]
        %v528 = vld [vmem:[#allocation8 + $0x18] sm:$0xf]
        %v529 = vld [vmem:[#allocation8 + $0x1c] sm:$0xf]
        %v530 = vld [vmem:[#allocation8 + $0x20] sm:$0xf]
        %v531 = vld [vmem:[#allocation8 + $0x24] sm:$0xf]
        %v532 = vld [vmem:[#allocation8 + $0x28] sm:$0xf]
        %v533 = vld [vmem:[#allocation8 + $0x2c] sm:$0xf]
        %v534 = vld [vmem:[#allocation8 + $0x30] sm:$0xf]
        %v535 = vld [vmem:[#allocation8 + $0x34] sm:$0xf]
        %v536 = vld [vmem:[#allocation8 + $0x38] sm:$0xf]
        %v537 = vld [vmem:[#allocation8 + $0x3c] sm:$0xf]
        %v538 = vld [vmem:[%s6] sm:$0x1]
        %v539 = vpack.c.bf16 %v521, %v521
        %v541 = vlaneseq
        %v542 = vshrl.u32 %v541, 7
        %v543 = vsub.s32 0, %v542
        %v544 = vrot.slane %v538, %v543
        %v562 = vunpack.c.l.b16 %v522
        %v563 = vunpack.c.l.b16 %v523
        %v564 = vunpack.c.l.b16 %v524
        %v565 = vunpack.c.l.b16 %v525
        %v566 = vunpack.c.l.b16 %v526
        %v567 = vunpack.c.l.b16 %v527
        %v568 = vunpack.c.l.b16 %v528
        %v569 = vunpack.c.l.b16 %v529
        %v570 = vunpack.c.l.b16 %v530
        %v571 = vunpack.c.l.b16 %v531
        %v572 = vunpack.c.l.b16 %v532
        %v573 = vunpack.c.l.b16 %v533
        %v574 = vunpack.c.l.b16 %v534
        %v575 = vunpack.c.l.b16 %v535
        %v576 = vunpack.c.l.b16 %v536
        %v577 = vunpack.c.l.b16 %v537
        %v578 = vpack.c.b16 %v563, %v562
        %v579 = vpack.c.b16 %v565, %v564
        %v580 = vpack.c.b16 %v567, %v566
        %v581 = vpack.c.b16 %v569, %v568
        %v582 = vpack.c.b16 %v571, %v570
        %v583 = vpack.c.b16 %v573, %v572
        %v584 = vpack.c.b16 %v575, %v574
        %v585 = vpack.c.b16 %v577, %v576
        %594 = vmatprep.subr.bf16.mxu0 0
        %595 = vmatpush1.bf16.msra.mxu0 %v585
        %596 = vmatprep.subr.bf16.mxu0 0
        %597 = vmatpush1.bf16.msra.mxu0 %v584
        %598 = vmatprep.subr.bf16.mxu0 0
        %599 = vmatpush1.bf16.msra.mxu0 %v583
        %600 = vmatprep.subr.bf16.mxu0 0
        %601 = vmatpush1.bf16.msra.mxu0 %v582
        %602 = vmatprep.subr.bf16.mxu0 0
        %603 = vmatpush1.bf16.msra.mxu0 %v581
        %604 = vmatprep.subr.bf16.mxu0 0
        %605 = vmatpush1.bf16.msra.mxu0 %v580
        %606 = vmatprep.subr.bf16.mxu0 0
        %607 = vmatpush1.bf16.msra.mxu0 %v579
        %608 = vmatprep.subr.bf16.mxu0 0
        %609 = vmatpush1.bf16.msra.mxu0 %v578
        %610 = vmatprep.subr.bf16.mxu0 0
        %611 = vmatpush2.bf16.msra.mxu0 0
        %612 = vmatprep.subr.bf16.mxu0 0
        %613 = vmatpush2.bf16.msra.mxu0 0
        %614 = vmatprep.subr.bf16.mxu0 0
        %615 = vmatpush2.bf16.msra.mxu0 0
        %616 = vmatprep.subr.bf16.mxu0 0
        %617 = vmatpush2.bf16.msra.mxu0 0
        %618 = vmatprep.subr.bf16.mxu0 0
        %619 = vmatpush2.bf16.msra.mxu0 0
        %620 = vmatprep.subr.bf16.mxu0 0
        %621 = vmatpush2.bf16.msra.mxu0 0
        %622 = vmatprep.subr.bf16.mxu0 0
        %623 = vmatpush2.bf16.msra.mxu0 0
        %624 = vmatprep.subr.bf16.mxu0 0
        %625 = vmatpush2.bf16.msra.mxu0 0
        %626 = vmatprep.mubr.bf16.mxu0 0
        %627 = vmatmul.mubr.bf16.gmra.mxu0 %v539
        %v628 = vpop.f32.mrf.mxu0
        %v629 = vadd.f32 %v544, %v628
        %v630 = vpop.f32.mrf.mxu0
        %v631 = vpop.f32.mrf.mxu0
        %v632 = vpop.f32.mrf.mxu0
        %633 = vdwg.mxu0
        %v634 = vmul.f32 %v629, 0.5
        %v635 = vtanh.pop %v634
        %v636 = vadd.f32 %v635, 1.0
        %v637 = vmul.f32 %v636, 0.5
        %638 = vst [vmem:[%s337] sm:$0xff] %v637
        %s639 = sand.u32 %s186, 1
        %s640 = scalar_lea.sflag [#allocation4], %s639
        %s641 = sand.u32 %s186, 1
        %s642 = smul.addr %s641, 8
        %s643 = scalar_lea.vmem [#allocation10], %s642
        // Predicated region
        $region65: #{tpu_custom_call.1} parent=47 // pred_check
          %p644 = pneg %p196
        $region66: #{tpu_custom_call.1} parent=47 // pred_check_branch
          %646 = sbr.rel (%p644) target = $region68
        $region67: #{tpu_custom_call.1} parent=47 // pred_region
          %s648 = ssub.s32 128, 128
          %649 = vsyncadd %s640, %s648
          %s650 = smul.addr %s26, 128
          %s651 = scalar_lea.hbm %s7, %s650
          %s653 = sshll.u32 %s643, 4
          %s654 = int_to_ptr.vmem [resolvable:$true] %s653
          %656 = dma.vmem_to_hbm [thread:$0]  %s654, 128, %s651, %s640
        $region68: #{tpu_custom_call.1} parent=47 // pred_fallthru
          _
      $region48: #{tpu_custom_call.1} parent=5 // pred_fallthru
        _
      %p657 = scmp.le.s32.totalorder 2, %s21
      // Predicated region
      $region69: #{tpu_custom_call.1} parent=5 // pred_check
        %p658 = pneg %p657
      $region70: #{tpu_custom_call.1} parent=5 // pred_check_branch
        %660 = sbr.rel (%p658) target = $region72
      $region71: #{tpu_custom_call.1} parent=5 // pred_region
        %s661 = ssub.s32 %s21, 2
        // Predicated region
        $region73: #{tpu_custom_call.1} parent=71 // pred_check
          %p662 = pneg %p202
        $region74: #{tpu_custom_call.1} parent=71 // pred_check_branch
          %664 = sbr.rel (%p662) target = $region76
        $region75: #{tpu_custom_call.1} parent=71 // pred_region
          %s665 = sand.u32 %s187, 1
          %s666 = scalar_lea.sflag [#allocation4], %s665
          %s667 = sand.u32 %s187, 1
          %s668 = smul.addr %s667, 8
          %s669 = scalar_lea.vmem [#allocation10], %s668
          %670 = dma.done %s666, 128
        $region76: #{tpu_custom_call.1} parent=71 // pred_fallthru
          _
      $region72: #{tpu_custom_call.1} parent=5 // pred_fallthru
        _
    $region6: #{tpu_custom_call.1} parent=1 // loop_footer
      %s25 = sadd.s32 1, %s21
    $region7: #{tpu_custom_call.1} parent=1 // loop_footer_branch
      %20 = sbr.rel target = $region3
    $region8: #{tpu_custom_call.1} parent=1 // loop_exit
      _
    %671 = vsyncpa [#allocation3], 1
    %s672 = scalar_lea.sflag [#allocation3], 1
    %673 = vsyncpa %s672, 1
    %674 = vsyncpa [#allocation6], 1
    %675 = vsyncpa [#allocation9], 1
    %676 = vsyncpa [#allocation4], 1
    %s677 = scalar_lea.sflag [#allocation4], 1
    %678 = vsyncpa %s677, 1

</llo_original>
